<compile_context>
chip_gen: v7x
topology: tpu7x:2x2x1
jax: 0.10.0
libtpu: 0.0.40
codegen_flags: <defaults>
</compile_context>

<pallas_src>
import jax
import jax.numpy as jnp
from jax.experimental import pallas as pl
from jax.experimental.pallas import tpu as pltpu

LANES = 128
SUBLANES = 8
MAX_BLOCK_ROWS = 8192                  # 8192*128*4B = 4 MiB per input per buffer
VMEM_LIMIT_BYTES = 32 * 1024 * 1024    # <= physical VMEM on v5e/v6e/v7x


def _cdiv(a, b):
    return -(-a // b)


def _round_up(a, b):
    return _cdiv(a, b) * b


def _num_tensorcores():
    """TensorCores per chip (v7x: 2, v5e/v6e: 1). Conservative fallback: 1."""
    try:
        info = pltpu.get_tpu_info()
    except Exception:
        return 1
    for name in ("num_cores", "core_count", "num_tensorcores",
                 "tensorcore_count", "num_tensor_cores", "cores_per_chip"):
        v = getattr(info, name, None)
        if isinstance(v, int) and v >= 1:
            # Cap at 2 (current max TCs per chip) to bound blast radius of any
            # unexpected attribute meaning.
            return max(1, min(int(v), 2))
    return 1


def _make_mse_kernel(block_rows, blocks_per_core, total_rows,
                     first_masked_block, needs_mask, pad_rows):
    def kernel(x_ref, t_ref, out_ref):
        j = pl.program_id(1)   # reduction axis (output block resident across it)

        @pl.when(j == 0)
        def _():
            out_ref[...] = jnp.zeros_like(out_ref)

        def accum(sq):
            # vreg-shaped accumulation: pure VPU adds; the cross-lane/sublane
            # reduction is deferred to the (tiny) wrapper-side jnp.sum.
            out_ref[...] += jnp.sum(sq.reshape(-1, SUBLANES, LANES), axis=0)

        if needs_mask:
            b = pl.program_id(0) * blocks_per_core + j
            is_tail = b >= first_masked_block   # partial tail or dummy block

            @pl.when(jnp.logical_not(is_tail))
            def _():
                d = x_ref[...].astype(jnp.float32) - t_ref[...].astype(jnp.float32)
                accum(d * d)

            @pl.when(is_tail)
            def _():
                d = x_ref[...].astype(jnp.float32) - t_ref[...].astype(jnp.float32)
                sq = d * d
                row = b * block_rows + jax.lax.broadcasted_iota(
                    jnp.int32, sq.shape, 0)
                accum(jnp.where(row < total_rows, sq, 0.0))
        else:
            d = x_ref[...].astype(jnp.float32) - t_ref[...].astype(jnp.float32)
            sq = d * d
            if pad_rows:
                # Only hit in the single-block case when M is not a multiple
                # of 8; zeros contribute nothing to the sum.
                sq = jnp.concatenate(
                    [sq, jnp.zeros((pad_rows, LANES), jnp.float32)], axis=0)
            accum(sq)

    return kernel


def content_loss_forward(x, target):
    """Returns (input, loss): identity pass-through + scalar MSE, like ContentLoss."""
    assert x.shape == target.shape, "input/target shape mismatch"
    n_elems = x.size
    inv_n = 1.0 / float(n_elems)   # static at trace time -> no scalar prefetch

    flat_x = x.reshape(-1)
    flat_t = target.reshape(-1)
    rem = n_elems % LANES
    if rem:
        # TODO(synk): ragged sizes (n % 128 != 0) fall back to a host-side pad
        # (an extra HBM pass); real style-transfer feature maps are 128-divisible
        # so this path is essentially never taken.
        pad = LANES - rem
        flat_x = jnp.pad(flat_x, (0, pad))
        flat_t = jnp.pad(flat_t, (0, pad))
    m = flat_x.shape[0] // LANES
    x2d = flat_x.reshape(m, LANES)
    t2d = flat_t.reshape(m, LANES)

    n_cores = _num_tensorcores()

    # --- tiling: block count is a multiple of n_cores, so every core gets real
    # work and (for realistic sizes) no dummy clamped blocks exist. ---
    n_blocks = max(_cdiv(m, MAX_BLOCK_ROWS), 1)
    n_blocks = _round_up(n_blocks, n_cores)
    if n_blocks == 1:
        block_rows = m                      # full array dim: always a legal block
        pad_rows = (-m) % SUBLANES
    else:
        block_rows = _round_up(_cdiv(m, n_blocks), SUBLANES)
        pad_rows = 0
    blocks_per_core = n_blocks // n_cores

    first_masked_block = m // block_rows          # blocks >= this need masking
    needs_mask = first_masked_block < n_blocks
    last_inbounds_block = _cdiv(m, block_rows) - 1
    # A fully out-of-bounds (dummy) block can only exist for degenerate tiny
    # inputs split across cores; clamp its DMA index and let the mask zero it.
    has_dummy = (n_blocks - 1) * block_rows >= m

    def in_map(c, j):
        b = c * blocks_per_core + j
        if has_dummy:
            b = jnp.minimum(b, last_inbounds_block)
        return (b, 0)

    kernel = _make_mse_kernel(block_rows, blocks_per_core, m,
                              first_masked_block, needs_mask, pad_rows)

    if n_cores > 1:
        core_sem = getattr(pltpu, "CORE_PARALLEL", "parallel")
        dim_sems = (core_sem, "arbitrary")
    else:
        dim_sems = ("arbitrary", "arbitrary")

    partials = pl.pallas_call(
        kernel,
        out_shape=jax.ShapeDtypeStruct((n_cores * SUBLANES, LANES), jnp.float32),
        grid_spec=pltpu.PrefetchScalarGridSpec(
            num_scalar_prefetch=0,
            grid=(n_cores, blocks_per_core),
            in_specs=[
                pl.BlockSpec((block_rows, LANES), in_map),
                pl.BlockSpec((block_rows, LANES), in_map),
            ],
            out_specs=pl.BlockSpec((SUBLANES, LANES), lambda c, j: (c, 0)),
        ),
        compiler_params=pltpu.CompilerParams(
            dimension_semantics=dim_sems,
            vmem_limit_bytes=VMEM_LIMIT_BYTES,
        ),
        cost_estimate=pl.CostEstimate(
            flops=3 * n_elems,
            transcendentals=0,
            bytes_accessed=8 * n_elems,
        ),
    )(x2d, t2d)

    # Tiny wrapper-side final reduction: sum over n_cores*8*128 partials, * 1/N.
    loss = jnp.sum(partials) * jnp.float32(inv_n)

    # Module returns its input unchanged; the loss is the side computation.
    # TODO(synk): PyTorch stores self.loss as module state; here it is returned.
    return x, loss


if __name__ == "__main__":
    key = jax.random.PRNGKey(0)
    k1, k2 = jax.random.split(key)

    # Small feature-map-like shapes: batch=2, channels=4, spatial=16x16 (NCHW).
    x = jax.random.normal(k1, (2, 4, 16, 16), dtype=jnp.float32)
    target = jax.random.normal(k2, (2, 4, 16, 16), dtype=jnp.float32)

    out, loss = content_loss_forward(x, target)
    out = jax.block_until_ready(out)
    loss = jax.block_until_ready(loss)

    # Correctness check against plain-JAX reference of F.mse_loss (mean reduction).
    ref_loss = jnp.mean((x - target) ** 2)
    assert jnp.allclose(loss, ref_loss, rtol=1e-5, atol=1e-6), (loss, ref_loss)
    assert jnp.array_equal(out, x)

    print("KERNEL_OK")
</pallas_src>

<mosaic_0001>
module attributes {stable_mosaic.version = 11 : i64} {
  func.func @kernel(%arg0: i32, %arg1: i32, %arg2: memref<16x128xf32, #tpu.memory_space<vmem>>, %arg3: memref<16x128xf32, #tpu.memory_space<vmem>>, %arg4: memref<8x128xf32, #tpu.memory_space<vmem>>) attributes {dimension_semantics = [#tpu.dimension_semantics<arbitrary>, #tpu.dimension_semantics<arbitrary>], iteration_bounds = array<i64: 1, 1>, scalar_prefetch = 0 : i64, scratch_operands = 0 : i64, tpu.core_type = #tpu.core_type<tc>, window_params = [{transform_indices = @transform_0, window_bounds = array<i64: 16, 128>}, {transform_indices = @transform_1, window_bounds = array<i64: 16, 128>}, {transform_indices = @transform_2, window_bounds = array<i64: 8, 128>}]} {
    %c0_i32 = arith.constant 0 : i32
    %0 = arith.cmpi eq, %arg1, %c0_i32 : i32
    %1 = arith.extui %0 : i1 to i32
    %c0_i32_0 = arith.constant 0 : i32
    %2 = arith.cmpi ne, %1, %c0_i32_0 : i32
    scf.if %2 {
      %cst_8 = arith.constant 0.000000e+00 : f32
      %12 = vector.broadcast %cst_8 : f32 to vector<8x128xf32>
      %c0_9 = arith.constant 0 : index
      %c0_10 = arith.constant 0 : index
      %13 = vector.load %arg4[%c0_9, %c0_10] : memref<8x128xf32, #tpu.memory_space<vmem>>, vector<8x128xf32>
      tpu.vector_store %arg4[%c0_9, %c0_10], %12 {strides = array<i32>} : memref<8x128xf32, #tpu.memory_space<vmem>>, vector<8x128xf32>,
    } else {
    }
    %c0 = arith.constant 0 : index
    %c0_1 = arith.constant 0 : index
    %3 = vector.load %arg2[%c0, %c0_1] : memref<16x128xf32, #tpu.memory_space<vmem>>, vector<16x128xf32>
    %c0_2 = arith.constant 0 : index
    %c0_3 = arith.constant 0 : index
    %4 = vector.load %arg3[%c0_2, %c0_3] : memref<16x128xf32, #tpu.memory_space<vmem>>, vector<16x128xf32>
    %5 = arith.subf %3, %4 : vector<16x128xf32>
    %6 = arith.mulf %5, %5 : vector<16x128xf32>
    %c0_4 = arith.constant 0 : index
    %c0_5 = arith.constant 0 : index
    %7 = vector.load %arg4[%c0_4, %c0_5] : memref<8x128xf32, #tpu.memory_space<vmem>>, vector<8x128xf32>
    %8 = vector.shape_cast %6 : vector<16x128xf32> to vector<2x8x128xf32>
    %cst = arith.constant dense<0.000000e+00> : vector<8x128xf32>
    %9 = vector.multi_reduction <add>, %8, %cst [0] : vector<2x8x128xf32> to vector<8x128xf32>
    %10 = arith.addf %7, %9 : vector<8x128xf32>
    %c0_6 = arith.constant 0 : index
    %c0_7 = arith.constant 0 : index
    %11 = vector.load %arg4[%c0_6, %c0_7] : memref<8x128xf32, #tpu.memory_space<vmem>>, vector<8x128xf32>
    tpu.vector_store %arg4[%c0_6, %c0_7], %10 {strides = array<i32>} : memref<8x128xf32, #tpu.memory_space<vmem>>, vector<8x128xf32>,
    return
  }
  func.func @transform_0(%arg0: i32, %arg1: i32) -> (i32, i32) {
    %c1_i32 = arith.constant 1 : i32
    %0 = arith.muli %arg0, %c1_i32 : i32
    %1 = arith.addi %0, %arg1 : i32
    %c0_i32 = arith.constant 0 : i32
    %c0_i32_0 = arith.constant 0 : i32
    return %1, %c0_i32 : i32, i32
  }
  func.func @transform_1(%arg0: i32, %arg1: i32) -> (i32, i32) {
    %c1_i32 = arith.constant 1 : i32
    %0 = arith.muli %arg0, %c1_i32 : i32
    %1 = arith.addi %0, %arg1 : i32
    %c0_i32 = arith.constant 0 : i32
    %c0_i32_0 = arith.constant 0 : i32
    return %1, %c0_i32 : i32, i32
  }
  func.func @transform_2(%arg0: i32, %arg1: i32) -> (i32, i32) {
    %c0_i32 = arith.constant 0 : i32
    %c0_i32_0 = arith.constant 0 : i32
    return %arg0, %c0_i32 : i32, i32
  }
}

</mosaic_0001>

<llo_original>
// kernel: tpu_custom_call.1
$region0: #{tpu_custom_call.1}
  #allocation0 [shape = 'u32[]', space=smem, size = 0x4, offset = 0x4, fixed_abs, tag = 'smem constant byte address 0x4 - core index']
  #allocation1 [shape = 'u32[144,128]{1,0:T(1,128)}', space=vmem, size = 0x12000, scoped, tag = 'internal scratch']
  %s0 = inlined_call_operand.hbm [shape: f32[16,128], index: 0, kind: input, shape index: {}]
  %s1 = inlined_call_operand.hbm [shape: f32[16,128], index: 1, kind: input, shape index: {}]
  %s2 = inlined_call_operand.hbm [shape: f32[8,128], index: 2, kind: output, shape index: {}]
  %s3 = sld [smem:[#allocation0]]
  $region30: #{tpu_custom_call.1} parent=0
    _
  %s5 = ssub.s32 1, %s3
  %s6 = scalar_select 0, %s5, %s3
  $region1: #{tpu_custom_call.1} parent=0
    #allocation2 [shape = 'u8[8192]{0}', space=vmem, size = 0x2000, scoped, tag = 'input window, operand 0, single buffered']
    #allocation3 [shape = 's32[1]{0}', space=sflag, size = 0x4, scoped, tag = 'scoped memory for tpu_custom_call.1']
    #allocation4 [shape = 's32[1]{0}', space=sflag, size = 0x4, scoped, tag = 'scoped memory for tpu_custom_call.1']
    #allocation5 [shape = 'u8[8192]{0}', space=vmem, size = 0x2000, scoped, tag = 'input window, operand 1, single buffered']
    #allocation6 [shape = 's32[1]{0}', space=sflag, size = 0x4, scoped, tag = 'scoped memory for tpu_custom_call.1']
    #allocation7 [shape = 'u8[4096]{0}', space=vmem, size = 0x1000, scoped, tag = 'output window, operand 0, single buffered']
    %7 = vsyncpa [#allocation3], 0
    %8 = vsyncpa [#allocation6], 0
    %9 = vsyncpa [#allocation4], 0
    // Predicated region
    $region2: #{tpu_custom_call.1} parent=1 // pred_check
      _
    $region3: #{tpu_custom_call.1} parent=1 // pred_check_branch
      %11 = sbr.rel (0) target = $region5
    $region4: #{tpu_custom_call.1} parent=1 // pred_region
      %s12 = sadd.s32 0, 0
      %s13 = smul.u32 2, %s12
      %s15 = ssub.s32 256, 256
      %16 = vsyncadd [#allocation3], %s15
      %s17 = smul.addr %s13, 128
      %s18 = scalar_lea.hbm %s0, %s17
      %s19 = sshll.u32 [#allocation2], 4
      %s20 = int_to_ptr.vmem [resolvable:$true] %s19
      %25 = dma.hbm_to_vmem [thread:$0]  %s18, 256, %s20, [#allocation3], 128, 128, 8
    $region5: #{tpu_custom_call.1} parent=1 // pred_fallthru
      _
    // Predicated region
    $region6: #{tpu_custom_call.1} parent=1 // pred_check
      _
    $region7: #{tpu_custom_call.1} parent=1 // pred_check_branch
      %27 = sbr.rel (0) target = $region9
    $region8: #{tpu_custom_call.1} parent=1 // pred_region
      %s28 = sadd.s32 0, 0
      %s29 = smul.u32 2, %s28
      %s31 = ssub.s32 256, 256
      %32 = vsyncadd [#allocation6], %s31
      %s33 = smul.addr %s29, 128
      %s34 = scalar_lea.hbm %s1, %s33
      %s35 = sshll.u32 [#allocation5], 4
      %s36 = int_to_ptr.vmem [resolvable:$true] %s35
      %41 = dma.hbm_to_vmem [thread:$0]  %s34, 256, %s36, [#allocation6], 128, 128, 8
    $region9: #{tpu_custom_call.1} parent=1 // pred_fallthru
      _
    // Predicated region
    $region10: #{tpu_custom_call.1} parent=1 // pred_check
      _
    $region11: #{tpu_custom_call.1} parent=1 // pred_check_branch
      %43 = sbr.rel (0) target = $region13
    $region12: #{tpu_custom_call.1} parent=1 // pred_region
      %44 = dma.done [#allocation3], 256
    $region13: #{tpu_custom_call.1} parent=1 // pred_fallthru
      _
    // Predicated region
    $region14: #{tpu_custom_call.1} parent=1 // pred_check
      _
    $region15: #{tpu_custom_call.1} parent=1 // pred_check_branch
      %46 = sbr.rel (0) target = $region17
    $region16: #{tpu_custom_call.1} parent=1 // pred_region
      %47 = dma.done [#allocation6], 256
    $region17: #{tpu_custom_call.1} parent=1 // pred_fallthru
      _
    %s48 = sadd.s32 0, 0
    %s49 = smul.u32 2, %s48
    %s50 = sadd.s32 0, 0
    %s51 = smul.u32 2, %s50
    %p52 = scmp.eq.s32.totalorder 0, 0
    // Predicated region
    $region18: #{tpu_custom_call.1} parent=1 // pred_check
      %p53 = pneg %p52
    $region19: #{tpu_custom_call.1} parent=1 // pred_check_branch
      %55 = sbr.rel (%p53) target = $region21
    $region20: #{tpu_custom_call.1} parent=1 // pred_region
      %56 = vst [vmem:[#allocation7] sm:$0xff] 0.0
    $region21: #{tpu_custom_call.1} parent=1 // pred_fallthru
      _
    %v57 = vld [vmem:[#allocation2] sm:$0xff]
    %v58 = vld [vmem:[#allocation2 + $0x8] sm:$0xff]
    %v59 = vld [vmem:[#allocation5] sm:$0xff]
    %v60 = vld [vmem:[#allocation5 + $0x8] sm:$0xff]
    %v61 = vsub.f32 %v57, %v59
    %v62 = vsub.f32 %v58, %v60
    %v63 = vmul.f32 %v61, %v61
    %v64 = vmul.f32 %v62, %v62
    %v65 = vld [vmem:[#allocation7] sm:$0xff]
    %v66 = vadd.f32 %v63, %v64
    %v67 = vadd.f32 %v65, %v66
    %68 = vst [vmem:[#allocation7] sm:$0xff] %v67
    // Predicated region
    $region22: #{tpu_custom_call.1} parent=1 // pred_check
      _
    $region23: #{tpu_custom_call.1} parent=1 // pred_check_branch
      %70 = sbr.rel (0) target = $region25
    $region24: #{tpu_custom_call.1} parent=1 // pred_region
      %s72 = ssub.s32 128, 128
      %73 = vsyncadd [#allocation4], %s72
      %s75 = sshll.u32 [#allocation7], 4
      %s76 = int_to_ptr.vmem [resolvable:$true] %s75
      %78 = dma.vmem_to_hbm [thread:$0]  %s76, 128, %s2, [#allocation4]
    $region25: #{tpu_custom_call.1} parent=1 // pred_fallthru
      _
    // Predicated region
    $region26: #{tpu_custom_call.1} parent=1 // pred_check
      _
    $region27: #{tpu_custom_call.1} parent=1 // pred_check_branch
      %80 = sbr.rel (0) target = $region29
    $region28: #{tpu_custom_call.1} parent=1 // pred_region
      %81 = dma.done [#allocation4], 128
    $region29: #{tpu_custom_call.1} parent=1 // pred_fallthru
      _
    %82 = vsyncpa [#allocation3], 1
    %83 = vsyncpa [#allocation6], 1
    %84 = vsyncpa [#allocation4], 1

</llo_original>
